<compile_context>
chip_gen: v5e
topology: v5e:2x2
jax: 0.10.0
libtpu: 0.0.40
codegen_flags: <defaults>
</compile_context>

<pallas_src>
import jax
import jax.numpy as jnp
from jax import lax
from jax.experimental import pallas as pl
from jax.experimental.pallas import tpu as pltpu


def _round_up(x, m):
    return ((x + m - 1) // m) * m


def precompute_tables(params):
    """One-time preprocessing of model constants into a single packed slab.

    Slab layout (rows, 8-aligned offsets; LANE = 128 lanes wide, f32):
      [TBL0  : TBL0+V )   projected embedding table  emb @ W_ih^T + bias, cols [0:4H)
      [WHH0  : WHH0+H )   W_hh^T,                                        cols [0:4H)
      [WTAG0 : WTAG0+H)   W_tag^T,                                       cols [0:T)
      [BTAG0          ]   tag bias, cols [0:T) = b_tag, cols [T:TP) = -1e30
    """
    emb = params["embedding"].astype(jnp.float32)      # (V, E)
    w_ih = params["w_ih"].astype(jnp.float32)          # (4H, E) torch layout
    w_hh = params["w_hh"].astype(jnp.float32)          # (4H, H)
    bias = (params["b_ih"] + params["b_hh"]).astype(jnp.float32)   # (4H,)
    w_tag = params["w_tag"].astype(jnp.float32)        # (T, H)
    b_tag = params["b_tag"].astype(jnp.float32)        # (T,)

    V, _ = emb.shape
    H = w_hh.shape[1]
    T = w_tag.shape[0]
    H4 = 4 * H
    TP = _round_up(T, 128)                              # lane-dense tag width
    LANE = max(_round_up(H4, 128), TP)

    Vp = _round_up(V, 8)
    TBL0 = 0
    WHH0 = Vp
    WTAG0 = WHH0 + _round_up(H, 8)
    BTAG0 = WTAG0 + _round_up(H, 8)
    ROWS = _round_up(BTAG0 + 1, 8)

    # projected embedding table: folds the (S,E)@(E,4H) matmul + bias add.
    x_table = emb @ w_ih.T + bias                       # (V, 4H)

    slab = jnp.zeros((ROWS, LANE), jnp.float32)
    slab = slab.at[TBL0:TBL0 + V, :H4].set(x_table)
    slab = slab.at[WHH0:WHH0 + H, :H4].set(w_hh.T)
    slab = slab.at[WTAG0:WTAG0 + H, :T].set(w_tag.T)
    # padded tag lanes get bias -1e30 so they vanish under log_softmax
    # (exp underflows to 0, max unaffected).
    slab = slab.at[BTAG0, :TP].set(-1e30)
    slab = slab.at[BTAG0, :T].set(b_tag)

    return {
        "slab": slab,
        "H": H, "T": T, "H4": H4, "TP": TP,
        "offsets": (TBL0, WHH0, WTAG0, BTAG0),
    }


def lstm_tagger(sentence, packed):
    """sentence: (S,) int32 token ids. Returns (S, tagset_size) log-probs."""
    slab = packed["slab"]
    H, T, H4, TP = packed["H"], packed["T"], packed["H4"], packed["TP"]
    TBL0, WHH0, WTAG0, BTAG0 = packed["offsets"]
    S = sentence.shape[0]
    ROWS, LANE = slab.shape

    def kernel(ids_ref, slab_ref, out_ref, hs_ref):
        # loop-invariant recurrent weight, loaded once.
        w_hh = slab_ref[WHH0:WHH0 + H, :H4]             # (H, 4H)

        # lane-constant helpers: g (cell-candidate) band [2H, 3H) and the
        # tanh argument scale (0.5 on i/f/o bands -> sigmoid via tanh, 1 on g).
        lane = lax.broadcasted_iota(jnp.int32, (1, H4), 1)
        g_band = (lane >= 2 * H) & (lane < 3 * H)
        scale = jnp.where(g_band, 1.0, 0.5).astype(jnp.float32)

        h = jnp.zeros((1, H), jnp.float32)
        c = jnp.zeros((1, H), jnp.float32)
        for t in range(S):                              # S static -> unrolled
            # in-kernel row gather from the projected-embedding table.
            x_t = slab_ref[pl.ds(ids_ref[t], 1), :H4]   # (1, 4H)
            gates = x_t + jnp.dot(h, w_hh,
                                  preferred_element_type=jnp.float32)
            # single EUP push: sigmoid(x) = 0.5*tanh(x/2) + 0.5
            th = jnp.tanh(gates * scale)
            act = jnp.where(g_band, th, 0.5 * th + 0.5)
            i_g = act[:, 0:H]
            f_g = act[:, H:2 * H]
            g_g = act[:, 2 * H:3 * H]
            o_g = act[:, 3 * H:4 * H]
            c = f_g * c + i_g * g_g
            h = o_g * jnp.tanh(c)
            hs_ref[pl.ds(t, 1), :] = h                  # static row store

        hs = hs_ref[...]                                # (S, H)
        w_tag = slab_ref[WTAG0:WTAG0 + H, :TP]          # (H, TP)
        b_tag = slab_ref[BTAG0:BTAG0 + 1, :TP]          # (1, TP)
        tag = jnp.dot(hs, w_tag,
                      preferred_element_type=jnp.float32) + b_tag
        m = jnp.max(tag, axis=1, keepdims=True)
        shifted = tag - m
        lse = jnp.log(jnp.sum(jnp.exp(shifted), axis=1, keepdims=True))
        out_ref[...] = (shifted - lse)[:, :T]

    return pl.pallas_call(
        kernel,
        out_shape=jax.ShapeDtypeStruct((S, T), jnp.float32),
        grid_spec=pltpu.PrefetchScalarGridSpec(
            num_scalar_prefetch=1,
            grid=(1,),
            in_specs=[pl.BlockSpec((ROWS, LANE), lambda i, ids: (0, 0))],
            out_specs=pl.BlockSpec((S, T), lambda i, ids: (0, 0)),
            scratch_shapes=[pltpu.VMEM((S, H), jnp.float32)],
        ),
        compiler_params=pltpu.CompilerParams(
            dimension_semantics=("arbitrary",)),
    )(sentence.astype(jnp.int32), slab)


def _reference(sentence, params):
    """Pure-JAX reference matching torch semantics (for verification)."""
    embeds = jnp.take(params["embedding"], sentence, axis=0)
    H = params["w_hh"].shape[1]
    w_ih_T = params["w_ih"].T
    w_hh_T = params["w_hh"].T
    bias = params["b_ih"] + params["b_hh"]

    def step(carry, x_t):
        h, c = carry
        gates = x_t @ w_ih_T + h @ w_hh_T + bias
        i_g = jax.nn.sigmoid(gates[0:H])
        f_g = jax.nn.sigmoid(gates[H:2 * H])
        g_g = jnp.tanh(gates[2 * H:3 * H])
        o_g = jax.nn.sigmoid(gates[3 * H:4 * H])
        c_new = f_g * c + i_g * g_g
        h_new = o_g * jnp.tanh(c_new)
        return (h_new, c_new), h_new

    init = (jnp.zeros((H,), jnp.float32), jnp.zeros((H,), jnp.float32))
    _, hs = lax.scan(step, init, embeds)
    tag_space = hs @ params["w_tag"].T + params["b_tag"]
    return jax.nn.log_softmax(tag_space, axis=1)


def make_params(key, vocab_size, embedding_dim, hidden_dim, tagset_size):
    ks = jax.random.split(key, 7)
    s = 1.0 / jnp.sqrt(hidden_dim)
    u = lambda k, shape, scale: jax.random.uniform(
        k, shape, jnp.float32, minval=-scale, maxval=scale)
    return {
        "embedding": jax.random.normal(ks[0], (vocab_size, embedding_dim),
                                       jnp.float32),
        "w_ih": u(ks[1], (4 * hidden_dim, embedding_dim), s),
        "w_hh": u(ks[2], (4 * hidden_dim, hidden_dim), s),
        "b_ih": u(ks[3], (4 * hidden_dim,), s),
        "b_hh": u(ks[4], (4 * hidden_dim,), s),
        "w_tag": u(ks[5], (tagset_size, hidden_dim), s),
        "b_tag": u(ks[6], (tagset_size,), s),
    }


if __name__ == "__main__":
    EMBEDDING_DIM = 16
    HIDDEN_DIM = 32
    VOCAB_SIZE = 20
    TAGSET_SIZE = 8
    SEQ_LEN = 8

    key = jax.random.PRNGKey(0)
    k_params, k_sent = jax.random.split(key)
    params = make_params(k_params, VOCAB_SIZE, EMBEDDING_DIM, HIDDEN_DIM,
                         TAGSET_SIZE)
    sentence = jax.random.randint(k_sent, (SEQ_LEN,), 0, VOCAB_SIZE,
                                  dtype=jnp.int32)

    # one-time model-constant preprocessing (not on the per-call path)
    packed = precompute_tables(params)
    packed["slab"] = jax.block_until_ready(packed["slab"])

    out = lstm_tagger(sentence, packed)
    out = jax.block_until_ready(out)

    ref = jax.block_until_ready(_reference(sentence, params))
    assert out.shape == (SEQ_LEN, TAGSET_SIZE)
    assert jnp.allclose(out, ref, atol=1e-4, rtol=1e-4), (
        f"max abs err {jnp.max(jnp.abs(out - ref))}")
    print("KERNEL_OK")
</pallas_src>

<mosaic_0001>
module attributes {stable_mosaic.version = 11 : i64} {
  func.func @kernel(%arg0: i32, %arg1: memref<8xi32, #tpu.memory_space<smem>>, %arg2: memref<96x128xf32, #tpu.memory_space<vmem>>, %arg3: memref<8x8xf32, #tpu.memory_space<vmem>>, %arg4: memref<8x32xf32, #tpu.memory_space<vmem>>) attributes {dimension_semantics = [#tpu.dimension_semantics<arbitrary>], iteration_bounds = array<i64: 1>, scalar_prefetch = 1 : i64, scratch_operands = 1 : i64, tpu.core_type = #tpu.core_type<tc>, window_params = [{pipeline_mode = #tpu.pipeline_mode<synchronous>, transform_indices = @transform_0, window_bounds = array<i64: 96, 128>}, {pipeline_mode = #tpu.pipeline_mode<synchronous>, transform_indices = @transform_1, window_bounds = array<i64: 8, 8>}]} {
    %c24 = arith.constant 24 : index
    %c0 = arith.constant 0 : index
    %0 = vector.load %arg2[%c24, %c0] : memref<96x128xf32, #tpu.memory_space<vmem>>, vector<32x128xf32>
    %1 = tpu.iota {dimensions = array<i32: 1>} : vector<1x128xi32>
    %c64_i32 = arith.constant 64 : i32
    %2 = vector.broadcast %c64_i32 : i32 to vector<1x128xi32>
    %3 = arith.cmpi sge, %1, %2 : vector<1x128xi32>
    %c96_i32 = arith.constant 96 : i32
    %4 = vector.broadcast %c96_i32 : i32 to vector<1x128xi32>
    %5 = arith.cmpi slt, %1, %4 : vector<1x128xi32>
    %6 = arith.andi %3, %5 : vector<1x128xi1>
    %cst = arith.constant 1.000000e+00 : f32
    %cst_0 = arith.constant 5.000000e-01 : f32
    %7 = vector.broadcast %cst : f32 to vector<1x128xf32>
    %8 = vector.broadcast %cst_0 : f32 to vector<1x128xf32>
    %9 = arith.select %6, %7, %8 : vector<1x128xi1>, vector<1x128xf32>
    %cst_1 = arith.constant 0.000000e+00 : f32
    %10 = vector.broadcast %cst_1 : f32 to vector<1x32xf32>
    %cst_2 = arith.constant 0.000000e+00 : f32
    %11 = vector.broadcast %cst_2 : f32 to vector<1x32xf32>
    %c0_3 = arith.constant 0 : index
    %12 = memref.load %arg1[%c0_3] : memref<8xi32, #tpu.memory_space<smem>>
    %13 = arith.index_cast %12 : i32 to index
    %c0_4 = arith.constant 0 : index
    %14 = vector.load %arg2[%13, %c0_4] : memref<96x128xf32, #tpu.memory_space<vmem>>, vector<1x128xf32>
    %cst_5 = arith.constant dense<0.000000e+00> : vector<1x128xf32>
    %15 = tpu.matmul %10, %0, %cst_5 {dimension_numbers = #tpu.dot_dimension_numbers<[1], [0], [0], [1], [0, 0, 1, 1], [], []>} : vector<1x32xf32>, vector<32x128xf32>, vector<1x128xf32> -> vector<1x128xf32>
    %16 = arith.addf %14, %15 : vector<1x128xf32>
    %17 = arith.mulf %16, %9 : vector<1x128xf32>
    %18 = math.tanh %17 : vector<1x128xf32>
    %cst_6 = arith.constant 5.000000e-01 : f32
    %19 = vector.broadcast %cst_6 : f32 to vector<1x128xf32>
    %20 = arith.mulf %19, %18 : vector<1x128xf32>
    %cst_7 = arith.constant 5.000000e-01 : f32
    %21 = vector.broadcast %cst_7 : f32 to vector<1x128xf32>
    %22 = arith.addf %20, %21 : vector<1x128xf32>
    %23 = arith.select %6, %18, %22 : vector<1x128xi1>, vector<1x128xf32>
    %24 = vector.extract_strided_slice %23 {offsets = [0, 0], sizes = [1, 32], strides = [1, 1]} : vector<1x128xf32> to vector<1x32xf32>
    %25 = vector.extract_strided_slice %23 {offsets = [0, 32], sizes = [1, 32], strides = [1, 1]} : vector<1x128xf32> to vector<1x32xf32>
    %26 = vector.extract_strided_slice %23 {offsets = [0, 64], sizes = [1, 32], strides = [1, 1]} : vector<1x128xf32> to vector<1x32xf32>
    %27 = vector.extract_strided_slice %23 {offsets = [0, 96], sizes = [1, 32], strides = [1, 1]} : vector<1x128xf32> to vector<1x32xf32>
    %28 = arith.mulf %25, %11 : vector<1x32xf32>
    %29 = arith.mulf %24, %26 : vector<1x32xf32>
    %30 = arith.addf %28, %29 : vector<1x32xf32>
    %31 = math.tanh %30 : vector<1x32xf32>
    %32 = arith.mulf %27, %31 : vector<1x32xf32>
    %c0_8 = arith.constant 0 : index
    %c0_9 = arith.constant 0 : index
    %33 = vector.load %arg4[%c0_8, %c0_9] : memref<8x32xf32, #tpu.memory_space<vmem>>, vector<1x32xf32>
    tpu.vector_store %arg4[%c0_8, %c0_9], %32 {strides = array<i32>} : memref<8x32xf32, #tpu.memory_space<vmem>>, vector<1x32xf32>,
    %c1 = arith.constant 1 : index
    %34 = memref.load %arg1[%c1] : memref<8xi32, #tpu.memory_space<smem>>
    %35 = arith.index_cast %34 : i32 to index
    %c0_10 = arith.constant 0 : index
    %36 = vector.load %arg2[%35, %c0_10] : memref<96x128xf32, #tpu.memory_space<vmem>>, vector<1x128xf32>
    %cst_11 = arith.constant dense<0.000000e+00> : vector<1x128xf32>
    %37 = tpu.matmul %32, %0, %cst_11 {dimension_numbers = #tpu.dot_dimension_numbers<[1], [0], [0], [1], [0, 0, 1, 1], [], []>} : vector<1x32xf32>, vector<32x128xf32>, vector<1x128xf32> -> vector<1x128xf32>
    %38 = arith.addf %36, %37 : vector<1x128xf32>
    %39 = arith.mulf %38, %9 : vector<1x128xf32>
    %40 = math.tanh %39 : vector<1x128xf32>
    %cst_12 = arith.constant 5.000000e-01 : f32
    %41 = vector.broadcast %cst_12 : f32 to vector<1x128xf32>
    %42 = arith.mulf %41, %40 : vector<1x128xf32>
    %cst_13 = arith.constant 5.000000e-01 : f32
    %43 = vector.broadcast %cst_13 : f32 to vector<1x128xf32>
    %44 = arith.addf %42, %43 : vector<1x128xf32>
    %45 = arith.select %6, %40, %44 : vector<1x128xi1>, vector<1x128xf32>
    %46 = vector.extract_strided_slice %45 {offsets = [0, 0], sizes = [1, 32], strides = [1, 1]} : vector<1x128xf32> to vector<1x32xf32>
    %47 = vector.extract_strided_slice %45 {offsets = [0, 32], sizes = [1, 32], strides = [1, 1]} : vector<1x128xf32> to vector<1x32xf32>
    %48 = vector.extract_strided_slice %45 {offsets = [0, 64], sizes = [1, 32], strides = [1, 1]} : vector<1x128xf32> to vector<1x32xf32>
    %49 = vector.extract_strided_slice %45 {offsets = [0, 96], sizes = [1, 32], strides = [1, 1]} : vector<1x128xf32> to vector<1x32xf32>
    %50 = arith.mulf %47, %30 : vector<1x32xf32>
    %51 = arith.mulf %46, %48 : vector<1x32xf32>
    %52 = arith.addf %50, %51 : vector<1x32xf32>
    %53 = math.tanh %52 : vector<1x32xf32>
    %54 = arith.mulf %49, %53 : vector<1x32xf32>
    %c1_14 = arith.constant 1 : index
    %c0_15 = arith.constant 0 : index
    %55 = vector.load %arg4[%c1_14, %c0_15] : memref<8x32xf32, #tpu.memory_space<vmem>>, vector<1x32xf32>
    tpu.vector_store %arg4[%c1_14, %c0_15], %54 {strides = array<i32>} : memref<8x32xf32, #tpu.memory_space<vmem>>, vector<1x32xf32>,
    %c2 = arith.constant 2 : index
    %56 = memref.load %arg1[%c2] : memref<8xi32, #tpu.memory_space<smem>>
    %57 = arith.index_cast %56 : i32 to index
    %c0_16 = arith.constant 0 : index
    %58 = vector.load %arg2[%57, %c0_16] : memref<96x128xf32, #tpu.memory_space<vmem>>, vector<1x128xf32>
    %cst_17 = arith.constant dense<0.000000e+00> : vector<1x128xf32>
    %59 = tpu.matmul %54, %0, %cst_17 {dimension_numbers = #tpu.dot_dimension_numbers<[1], [0], [0], [1], [0, 0, 1, 1], [], []>} : vector<1x32xf32>, vector<32x128xf32>, vector<1x128xf32> -> vector<1x128xf32>
    %60 = arith.addf %58, %59 : vector<1x128xf32>
    %61 = arith.mulf %60, %9 : vector<1x128xf32>
    %62 = math.tanh %61 : vector<1x128xf32>
    %cst_18 = arith.constant 5.000000e-01 : f32
    %63 = vector.broadcast %cst_18 : f32 to vector<1x128xf32>
    %64 = arith.mulf %63, %62 : vector<1x128xf32>
    %cst_19 = arith.constant 5.000000e-01 : f32
    %65 = vector.broadcast %cst_19 : f32 to vector<1x128xf32>
    %66 = arith.addf %64, %65 : vector<1x128xf32>
    %67 = arith.select %6, %62, %66 : vector<1x128xi1>, vector<1x128xf32>
    %68 = vector.extract_strided_slice %67 {offsets = [0, 0], sizes = [1, 32], strides = [1, 1]} : vector<1x128xf32> to vector<1x32xf32>
    %69 = vector.extract_strided_slice %67 {offsets = [0, 32], sizes = [1, 32], strides = [1, 1]} : vector<1x128xf32> to vector<1x32xf32>
    %70 = vector.extract_strided_slice %67 {offsets = [0, 64], sizes = [1, 32], strides = [1, 1]} : vector<1x128xf32> to vector<1x32xf32>
    %71 = vector.extract_strided_slice %67 {offsets = [0, 96], sizes = [1, 32], strides = [1, 1]} : vector<1x128xf32> to vector<1x32xf32>
    %72 = arith.mulf %69, %52 : vector<1x32xf32>
    %73 = arith.mulf %68, %70 : vector<1x32xf32>
    %74 = arith.addf %72, %73 : vector<1x32xf32>
    %75 = math.tanh %74 : vector<1x32xf32>
    %76 = arith.mulf %71, %75 : vector<1x32xf32>
    %c2_20 = arith.constant 2 : index
    %c0_21 = arith.constant 0 : index
    %77 = vector.load %arg4[%c2_20, %c0_21] : memref<8x32xf32, #tpu.memory_space<vmem>>, vector<1x32xf32>
    tpu.vector_store %arg4[%c2_20, %c0_21], %76 {strides = array<i32>} : memref<8x32xf32, #tpu.memory_space<vmem>>, vector<1x32xf32>,
    %c3 = arith.constant 3 : index
    %78 = memref.load %arg1[%c3] : memref<8xi32, #tpu.memory_space<smem>>
    %79 = arith.index_cast %78 : i32 to index
    %c0_22 = arith.constant 0 : index
    %80 = vector.load %arg2[%79, %c0_22] : memref<96x128xf32, #tpu.memory_space<vmem>>, vector<1x128xf32>
    %cst_23 = arith.constant dense<0.000000e+00> : vector<1x128xf32>
    %81 = tpu.matmul %76, %0, %cst_23 {dimension_numbers = #tpu.dot_dimension_numbers<[1], [0], [0], [1], [0, 0, 1, 1], [], []>} : vector<1x32xf32>, vector<32x128xf32>, vector<1x128xf32> -> vector<1x128xf32>
    %82 = arith.addf %80, %81 : vector<1x128xf32>
    %83 = arith.mulf %82, %9 : vector<1x128xf32>
    %84 = math.tanh %83 : vector<1x128xf32>
    %cst_24 = arith.constant 5.000000e-01 : f32
    %85 = vector.broadcast %cst_24 : f32 to vector<1x128xf32>
    %86 = arith.mulf %85, %84 : vector<1x128xf32>
    %cst_25 = arith.constant 5.000000e-01 : f32
    %87 = vector.broadcast %cst_25 : f32 to vector<1x128xf32>
    %88 = arith.addf %86, %87 : vector<1x128xf32>
    %89 = arith.select %6, %84, %88 : vector<1x128xi1>, vector<1x128xf32>
    %90 = vector.extract_strided_slice %89 {offsets = [0, 0], sizes = [1, 32], strides = [1, 1]} : vector<1x128xf32> to vector<1x32xf32>
    %91 = vector.extract_strided_slice %89 {offsets = [0, 32], sizes = [1, 32], strides = [1, 1]} : vector<1x128xf32> to vector<1x32xf32>
    %92 = vector.extract_strided_slice %89 {offsets = [0, 64], sizes = [1, 32], strides = [1, 1]} : vector<1x128xf32> to vector<1x32xf32>
    %93 = vector.extract_strided_slice %89 {offsets = [0, 96], sizes = [1, 32], strides = [1, 1]} : vector<1x128xf32> to vector<1x32xf32>
    %94 = arith.mulf %91, %74 : vector<1x32xf32>
    %95 = arith.mulf %90, %92 : vector<1x32xf32>
    %96 = arith.addf %94, %95 : vector<1x32xf32>
    %97 = math.tanh %96 : vector<1x32xf32>
    %98 = arith.mulf %93, %97 : vector<1x32xf32>
    %c3_26 = arith.constant 3 : index
    %c0_27 = arith.constant 0 : index
    %99 = vector.load %arg4[%c3_26, %c0_27] : memref<8x32xf32, #tpu.memory_space<vmem>>, vector<1x32xf32>
    tpu.vector_store %arg4[%c3_26, %c0_27], %98 {strides = array<i32>} : memref<8x32xf32, #tpu.memory_space<vmem>>, vector<1x32xf32>,
    %c4 = arith.constant 4 : index
    %100 = memref.load %arg1[%c4] : memref<8xi32, #tpu.memory_space<smem>>
    %101 = arith.index_cast %100 : i32 to index
    %c0_28 = arith.constant 0 : index
    %102 = vector.load %arg2[%101, %c0_28] : memref<96x128xf32, #tpu.memory_space<vmem>>, vector<1x128xf32>
    %cst_29 = arith.constant dense<0.000000e+00> : vector<1x128xf32>
    %103 = tpu.matmul %98, %0, %cst_29 {dimension_numbers = #tpu.dot_dimension_numbers<[1], [0], [0], [1], [0, 0, 1, 1], [], []>} : vector<1x32xf32>, vector<32x128xf32>, vector<1x128xf32> -> vector<1x128xf32>
    %104 = arith.addf %102, %103 : vector<1x128xf32>
    %105 = arith.mulf %104, %9 : vector<1x128xf32>
    %106 = math.tanh %105 : vector<1x128xf32>
    %cst_30 = arith.constant 5.000000e-01 : f32
    %107 = vector.broadcast %cst_30 : f32 to vector<1x128xf32>
    %108 = arith.mulf %107, %106 : vector<1x128xf32>
    %cst_31 = arith.constant 5.000000e-01 : f32
    %109 = vector.broadcast %cst_31 : f32 to vector<1x128xf32>
    %110 = arith.addf %108, %109 : vector<1x128xf32>
    %111 = arith.select %6, %106, %110 : vector<1x128xi1>, vector<1x128xf32>
    %112 = vector.extract_strided_slice %111 {offsets = [0, 0], sizes = [1, 32], strides = [1, 1]} : vector<1x128xf32> to vector<1x32xf32>
    %113 = vector.extract_strided_slice %111 {offsets = [0, 32], sizes = [1, 32], strides = [1, 1]} : vector<1x128xf32> to vector<1x32xf32>
    %114 = vector.extract_strided_slice %111 {offsets = [0, 64], sizes = [1, 32], strides = [1, 1]} : vector<1x128xf32> to vector<1x32xf32>
    %115 = vector.extract_strided_slice %111 {offsets = [0, 96], sizes = [1, 32], strides = [1, 1]} : vector<1x128xf32> to vector<1x32xf32>
    %116 = arith.mulf %113, %96 : vector<1x32xf32>
    %117 = arith.mulf %112, %114 : vector<1x32xf32>
    %118 = arith.addf %116, %117 : vector<1x32xf32>
    %119 = math.tanh %118 : vector<1x32xf32>
    %120 = arith.mulf %115, %119 : vector<1x32xf32>
    %c4_32 = arith.constant 4 : index
    %c0_33 = arith.constant 0 : index
    %121 = vector.load %arg4[%c4_32, %c0_33] : memref<8x32xf32, #tpu.memory_space<vmem>>, vector<1x32xf32>
    tpu.vector_store %arg4[%c4_32, %c0_33], %120 {strides = array<i32>} : memref<8x32xf32, #tpu.memory_space<vmem>>, vector<1x32xf32>,
    %c5 = arith.constant 5 : index
    %122 = memref.load %arg1[%c5] : memref<8xi32, #tpu.memory_space<smem>>
    %123 = arith.index_cast %122 : i32 to index
    %c0_34 = arith.constant 0 : index
    %124 = vector.load %arg2[%123, %c0_34] : memref<96x128xf32, #tpu.memory_space<vmem>>, vector<1x128xf32>
    %cst_35 = arith.constant dense<0.000000e+00> : vector<1x128xf32>
    %125 = tpu.matmul %120, %0, %cst_35 {dimension_numbers = #tpu.dot_dimension_numbers<[1], [0], [0], [1], [0, 0, 1, 1], [], []>} : vector<1x32xf32>, vector<32x128xf32>, vector<1x128xf32> -> vector<1x128xf32>
    %126 = arith.addf %124, %125 : vector<1x128xf32>
    %127 = arith.mulf %126, %9 : vector<1x128xf32>
    %128 = math.tanh %127 : vector<1x128xf32>
    %cst_36 = arith.constant 5.000000e-01 : f32
    %129 = vector.broadcast %cst_36 : f32 to vector<1x128xf32>
    %130 = arith.mulf %129, %128 : vector<1x128xf32>
    %cst_37 = arith.constant 5.000000e-01 : f32
    %131 = vector.broadcast %cst_37 : f32 to vector<1x128xf32>
    %132 = arith.addf %130, %131 : vector<1x128xf32>
    %133 = arith.select %6, %128, %132 : vector<1x128xi1>, vector<1x128xf32>
    %134 = vector.extract_strided_slice %133 {offsets = [0, 0], sizes = [1, 32], strides = [1, 1]} : vector<1x128xf32> to vector<1x32xf32>
    %135 = vector.extract_strided_slice %133 {offsets = [0, 32], sizes = [1, 32], strides = [1, 1]} : vector<1x128xf32> to vector<1x32xf32>
    %136 = vector.extract_strided_slice %133 {offsets = [0, 64], sizes = [1, 32], strides = [1, 1]} : vector<1x128xf32> to vector<1x32xf32>
    %137 = vector.extract_strided_slice %133 {offsets = [0, 96], sizes = [1, 32], strides = [1, 1]} : vector<1x128xf32> to vector<1x32xf32>
    %138 = arith.mulf %135, %118 : vector<1x32xf32>
    %139 = arith.mulf %134, %136 : vector<1x32xf32>
    %140 = arith.addf %138, %139 : vector<1x32xf32>
    %141 = math.tanh %140 : vector<1x32xf32>
    %142 = arith.mulf %137, %141 : vector<1x32xf32>
    %c5_38 = arith.constant 5 : index
    %c0_39 = arith.constant 0 : index
    %143 = vector.load %arg4[%c5_38, %c0_39] : memref<8x32xf32, #tpu.memory_space<vmem>>, vector<1x32xf32>
    tpu.vector_store %arg4[%c5_38, %c0_39], %142 {strides = array<i32>} : memref<8x32xf32, #tpu.memory_space<vmem>>, vector<1x32xf32>,
    %c6 = arith.constant 6 : index
    %144 = memref.load %arg1[%c6] : memref<8xi32, #tpu.memory_space<smem>>
    %145 = arith.index_cast %144 : i32 to index
    %c0_40 = arith.constant 0 : index
    %146 = vector.load %arg2[%145, %c0_40] : memref<96x128xf32, #tpu.memory_space<vmem>>, vector<1x128xf32>
    %cst_41 = arith.constant dense<0.000000e+00> : vector<1x128xf32>
    %147 = tpu.matmul %142, %0, %cst_41 {dimension_numbers = #tpu.dot_dimension_numbers<[1], [0], [0], [1], [0, 0, 1, 1], [], []>} : vector<1x32xf32>, vector<32x128xf32>, vector<1x128xf32> -> vector<1x128xf32>
    %148 = arith.addf %146, %147 : vector<1x128xf32>
    %149 = arith.mulf %148, %9 : vector<1x128xf32>
    %150 = math.tanh %149 : vector<1x128xf32>
    %cst_42 = arith.constant 5.000000e-01 : f32
    %151 = vector.broadcast %cst_42 : f32 to vector<1x128xf32>
    %152 = arith.mulf %151, %150 : vector<1x128xf32>
    %cst_43 = arith.constant 5.000000e-01 : f32
    %153 = vector.broadcast %cst_43 : f32 to vector<1x128xf32>
    %154 = arith.addf %152, %153 : vector<1x128xf32>
    %155 = arith.select %6, %150, %154 : vector<1x128xi1>, vector<1x128xf32>
    %156 = vector.extract_strided_slice %155 {offsets = [0, 0], sizes = [1, 32], strides = [1, 1]} : vector<1x128xf32> to vector<1x32xf32>
    %157 = vector.extract_strided_slice %155 {offsets = [0, 32], sizes = [1, 32], strides = [1, 1]} : vector<1x128xf32> to vector<1x32xf32>
    %158 = vector.extract_strided_slice %155 {offsets = [0, 64], sizes = [1, 32], strides = [1, 1]} : vector<1x128xf32> to vector<1x32xf32>
    %159 = vector.extract_strided_slice %155 {offsets = [0, 96], sizes = [1, 32], strides = [1, 1]} : vector<1x128xf32> to vector<1x32xf32>
    %160 = arith.mulf %157, %140 : vector<1x32xf32>
    %161 = arith.mulf %156, %158 : vector<1x32xf32>
    %162 = arith.addf %160, %161 : vector<1x32xf32>
    %163 = math.tanh %162 : vector<1x32xf32>
    %164 = arith.mulf %159, %163 : vector<1x32xf32>
    %c6_44 = arith.constant 6 : index
    %c0_45 = arith.constant 0 : index
    %165 = vector.load %arg4[%c6_44, %c0_45] : memref<8x32xf32, #tpu.memory_space<vmem>>, vector<1x32xf32>
    tpu.vector_store %arg4[%c6_44, %c0_45], %164 {strides = array<i32>} : memref<8x32xf32, #tpu.memory_space<vmem>>, vector<1x32xf32>,
    %c7 = arith.constant 7 : index
    %166 = memref.load %arg1[%c7] : memref<8xi32, #tpu.memory_space<smem>>
    %167 = arith.index_cast %166 : i32 to index
    %c0_46 = arith.constant 0 : index
    %168 = vector.load %arg2[%167, %c0_46] : memref<96x128xf32, #tpu.memory_space<vmem>>, vector<1x128xf32>
    %cst_47 = arith.constant dense<0.000000e+00> : vector<1x128xf32>
    %169 = tpu.matmul %164, %0, %cst_47 {dimension_numbers = #tpu.dot_dimension_numbers<[1], [0], [0], [1], [0, 0, 1, 1], [], []>} : vector<1x32xf32>, vector<32x128xf32>, vector<1x128xf32> -> vector<1x128xf32>
    %170 = arith.addf %168, %169 : vector<1x128xf32>
    %171 = arith.mulf %170, %9 : vector<1x128xf32>
    %172 = math.tanh %171 : vector<1x128xf32>
    %cst_48 = arith.constant 5.000000e-01 : f32
    %173 = vector.broadcast %cst_48 : f32 to vector<1x128xf32>
    %174 = arith.mulf %173, %172 : vector<1x128xf32>
    %cst_49 = arith.constant 5.000000e-01 : f32
    %175 = vector.broadcast %cst_49 : f32 to vector<1x128xf32>
    %176 = arith.addf %174, %175 : vector<1x128xf32>
    %177 = arith.select %6, %172, %176 : vector<1x128xi1>, vector<1x128xf32>
    %178 = vector.extract_strided_slice %177 {offsets = [0, 0], sizes = [1, 32], strides = [1, 1]} : vector<1x128xf32> to vector<1x32xf32>
    %179 = vector.extract_strided_slice %177 {offsets = [0, 32], sizes = [1, 32], strides = [1, 1]} : vector<1x128xf32> to vector<1x32xf32>
    %180 = vector.extract_strided_slice %177 {offsets = [0, 64], sizes = [1, 32], strides = [1, 1]} : vector<1x128xf32> to vector<1x32xf32>
    %181 = vector.extract_strided_slice %177 {offsets = [0, 96], sizes = [1, 32], strides = [1, 1]} : vector<1x128xf32> to vector<1x32xf32>
    %182 = arith.mulf %179, %162 : vector<1x32xf32>
    %183 = arith.mulf %178, %180 : vector<1x32xf32>
    %184 = arith.addf %182, %183 : vector<1x32xf32>
    %185 = math.tanh %184 : vector<1x32xf32>
    %186 = arith.mulf %181, %185 : vector<1x32xf32>
    %c7_50 = arith.constant 7 : index
    %c0_51 = arith.constant 0 : index
    %187 = vector.load %arg4[%c7_50, %c0_51] : memref<8x32xf32, #tpu.memory_space<vmem>>, vector<1x32xf32>
    tpu.vector_store %arg4[%c7_50, %c0_51], %186 {strides = array<i32>} : memref<8x32xf32, #tpu.memory_space<vmem>>, vector<1x32xf32>,
    %c0_52 = arith.constant 0 : index
    %c0_53 = arith.constant 0 : index
    %188 = vector.load %arg4[%c0_52, %c0_53] : memref<8x32xf32, #tpu.memory_space<vmem>>, vector<8x32xf32>
    %c56 = arith.constant 56 : index
    %c0_54 = arith.constant 0 : index
    %189 = vector.load %arg2[%c56, %c0_54] : memref<96x128xf32, #tpu.memory_space<vmem>>, vector<32x128xf32>
    %c88 = arith.constant 88 : index
    %c0_55 = arith.constant 0 : index
    %190 = vector.load %arg2[%c88, %c0_55] : memref<96x128xf32, #tpu.memory_space<vmem>>, vector<1x128xf32>
    %cst_56 = arith.constant dense<0.000000e+00> : vector<8x128xf32>
    %191 = tpu.matmul %188, %189, %cst_56 {dimension_numbers = #tpu.dot_dimension_numbers<[1], [0], [0], [1], [0, 0, 1, 1], [], []>} : vector<8x32xf32>, vector<32x128xf32>, vector<8x128xf32> -> vector<8x128xf32>
    %192 = vector.broadcast %190 : vector<1x128xf32> to vector<8x128xf32>
    %193 = arith.addf %191, %192 : vector<8x128xf32>
    %cst_57 = arith.constant dense<0xFF800000> : vector<8xf32>
    %194 = vector.multi_reduction <maximumf>, %193, %cst_57 [1] : vector<8x128xf32> to vector<8xf32>
    %195 = vector.shape_cast %194 : vector<8xf32> to vector<8x1xf32>
    %196 = vector.broadcast %195 : vector<8x1xf32> to vector<8x128xf32>
    %197 = arith.subf %193, %196 : vector<8x128xf32>
    %198 = math.exp %197 : vector<8x128xf32>
    %cst_58 = arith.constant dense<0.000000e+00> : vector<8xf32>
    %199 = vector.multi_reduction <add>, %198, %cst_58 [1] : vector<8x128xf32> to vector<8xf32>
    %200 = vector.shape_cast %199 : vector<8xf32> to vector<8x1xf32>
    %201 = math.log %200 : vector<8x1xf32>
    %202 = vector.broadcast %201 : vector<8x1xf32> to vector<8x128xf32>
    %203 = arith.subf %197, %202 : vector<8x128xf32>
    %204 = vector.extract_strided_slice %203 {offsets = [0, 0], sizes = [8, 8], strides = [1, 1]} : vector<8x128xf32> to vector<8x8xf32>
    %c0_59 = arith.constant 0 : index
    %c0_60 = arith.constant 0 : index
    %205 = vector.load %arg3[%c0_59, %c0_60] : memref<8x8xf32, #tpu.memory_space<vmem>>, vector<8x8xf32>
    tpu.vector_store %arg3[%c0_59, %c0_60], %204 {strides = array<i32>} : memref<8x8xf32, #tpu.memory_space<vmem>>, vector<8x8xf32>,
    return
  }
  func.func @transform_0(%arg0: i32, %arg1: memref<8xi32, #tpu.memory_space<smem>>) -> (i32, i32) {
    %c0_i32 = arith.constant 0 : i32
    %c0_i32_0 = arith.constant 0 : i32
    %c0_i32_1 = arith.constant 0 : i32
    return %c0_i32, %c0_i32_0 : i32, i32
  }
  func.func @transform_1(%arg0: i32, %arg1: memref<8xi32, #tpu.memory_space<smem>>) -> (i32, i32) {
    %c0_i32 = arith.constant 0 : i32
    %c0_i32_0 = arith.constant 0 : i32
    %c0_i32_1 = arith.constant 0 : i32
    return %c0_i32, %c0_i32_0 : i32, i32
  }
}

</mosaic_0001>

<llo_original>
// kernel: tpu_custom_call.1
$region0: #{tpu_custom_call.1}
  #allocation0 [shape = 'u32[]', space=smem, size = 0x4, offset = 0x4, fixed_abs, tag = 'smem constant byte address 0x4 - core index']
  #allocation1 [shape = 'u32[72,128]{1,0:T(1,128)}', space=vmem, size = 0x9000, scoped, tag = 'internal scratch']
  #allocation2 [shape = 'f32[8,32]{1,0:T(8,128)}', space=vmem, size = 0x1000, scoped, tag = 'scratch operand']
  #allocation3 [shape = 's32[1]{0}', space=sflag, size = 0x4, scoped, tag = 'scoped memory for tpu_custom_call.1']
  #allocation4 [shape = 'u8[512]{0}', space=smem, size = 0x200, scoped, tag = 'prefetched SMEM operand 0']
  %s0 = inlined_call_operand.hbm [shape: s32[8], index: 0, kind: input, shape index: {}]
  %s1 = inlined_call_operand.hbm [shape: f32[96,128], index: 1, kind: input, shape index: {}]
  %s2 = inlined_call_operand.hbm [shape: f32[8,8], index: 2, kind: output, shape index: {}]
  %s3 = sld [smem:[#allocation0]]
  $region18: #{tpu_custom_call.1} parent=0
    _
  %s5 = ssub.s32 1, %s3
  %s6 = scalar_select 0, %s5, %s3
  %s8 = sshll.u32 %s0, 4
  %s9 = int_to_ptr.hbm [resolvable:$true] %s8
  %11 = dma.hbm_to_smem %s9, 16, [#allocation4], [#allocation3]
  %13 = dma.done [#allocation3], 16
  %14 = sfence
  $region1: #{tpu_custom_call.1} parent=0
    #allocation5 [shape = 'u8[49152]{0}', space=vmem, size = 0xc000, scoped, tag = 'input window, operand 1, single buffered']
    #allocation6 [shape = 's32[1]{0}', space=sflag, size = 0x4, scoped, tag = 'scoped memory for tpu_custom_call.1']
    #allocation7 [shape = 's32[1]{0}', space=sflag, size = 0x4, scoped, tag = 'scoped memory for tpu_custom_call.1']
    #allocation8 [shape = 'u8[4096]{0}', space=vmem, size = 0x1000, scoped, tag = 'output window, operand 0, single buffered']
    %15 = vsyncpa [#allocation6], 0
    %16 = vsyncpa [#allocation7], 0
    // Predicated region
    $region2: #{tpu_custom_call.1} parent=1 // pred_check
      _
    $region3: #{tpu_custom_call.1} parent=1 // pred_check_branch
      %18 = sbr.rel (0) target = $region5
    $region4: #{tpu_custom_call.1} parent=1 // pred_region
      %20 = vsyncadd [#allocation6], 0
      %s21 = sshll.u32 %s1, 4
      %s22 = int_to_ptr.hbm [resolvable:$true] %s21
      %s23 = sshll.u32 [#allocation5], 4
      %s24 = int_to_ptr.vmem [resolvable:$true] %s23
      %29 = dma.hbm_to_vmem [thread:$0]  %s22, 1536, %s24, [#allocation6], 128, 128, 8
    $region5: #{tpu_custom_call.1} parent=1 // pred_fallthru
      _
    // Predicated region
    $region6: #{tpu_custom_call.1} parent=1 // pred_check
      _
    $region7: #{tpu_custom_call.1} parent=1 // pred_check_branch
      %31 = sbr.rel (0) target = $region9
    $region8: #{tpu_custom_call.1} parent=1 // pred_region
      %33 = dma.done [#allocation6], 1536
    $region9: #{tpu_custom_call.1} parent=1 // pred_fallthru
      _
    %v34 = vld [vmem:[#allocation5 + $0x18] sm:$0xff]
    %v35 = vld [vmem:[#allocation5 + $0x20] sm:$0xff]
    %v36 = vld [vmem:[#allocation5 + $0x28] sm:$0xff]
    %v37 = vld [vmem:[#allocation5 + $0x30] sm:$0xff]
    %v38 = vlaneseq
    %v39 = vand.u32 %v38, 127
    %vm40 = vcmp.ge.s32.totalorder %v39, 64
    %vm41 = vcmp.lt.s32.totalorder %v39, 96
    %vm42 = vmand %vm40, %vm41
    %v43 = vsel %vm42, 1.0, 0.5
    %s44 = sld [smem:[#allocation4]]
    %s45 = scalar_lea.vmem [#allocation5], %s44
    %v46 = vld [vmem:[%s45] sm:$0x1]
    %vm47 = vcmask 261120
    %v49 = vsel %vm47, 0.0, 0
    %51 = vmatpush.msra.mxu0 0.0
    %52 = vmatpush.msra.mxu0 0.0
    %53 = vmatpush.msra.mxu0 0.0
    %54 = vmatpush.msra.mxu0 0.0
    %55 = vmatpush.msra.mxu0 0.0
    %56 = vmatpush.msra.mxu0 0.0
    %57 = vmatpush.msra.mxu0 0.0
    %58 = vmatpush.msra.mxu0 0.0
    %59 = vmatpush.msra.mxu0 0.0
    %60 = vmatpush.msra.mxu0 0.0
    %61 = vmatpush.msra.mxu0 0.0
    %62 = vmatpush.msra.mxu0 0.0
    %63 = vmatpush.msra.mxu0 %v37
    %64 = vmatpush.msra.mxu0 %v36
    %65 = vmatpush.msra.mxu0 %v35
    %66 = vmatpush.msra.mxu0 %v34
    %67 = vmatmul.f32.gmra.mxu0 %v49
    %v68 = vpop.f32.mrf.mxu0
    %v69 = vadd.f32 0.0, %v68
    %70 = vdwg.mxu0
    %v71 = vadd.f32 %v46, %v69
    %v72 = vmul.f32 %v71, %v43
    %v73 = vtanh.pop %v72
    %v74 = vmul.f32 %v73, 0.5
    %v75 = vadd.f32 %v74, 0.5
    %v76 = vsel %vm42, %v73, %v75
    %v77 = vmul.f32 %v76, 0.0
    %79 = vrot.lane.b32.xlu0 %v76, 64
    %v80 = vpop.permute.xlu0 %79
    %v82 = vmul.f32 %v76, %v80
    %84 = vrot.lane.b32.xlu0 %v82, 32
    %v85 = vpop.permute.xlu0 %84
    %v87 = vadd.f32 %v77, %v85
    %v88 = vtanh.pop %v87
    %90 = vrot.lane.b32.xlu0 %v88, 64
    %v91 = vpop.permute.xlu0 %90
    %v93 = vmul.f32 %v76, %v91
    %95 = vrot.lane.b32.xlu0 %v93, 32
    %v96 = vpop.permute.xlu0 %95
    %vm98 = vcmask 253952
    %99 = vst.msk [vmem:[#allocation2] sm:$0x1] %vm98, %v96
    %s100 = sld [smem:[#allocation4 + $0x1]]
    %s101 = scalar_lea.vmem [#allocation5], %s100
    %v102 = vld [vmem:[%s101] sm:$0x1]
    %v103 = vsel %vm47, %v96, 0
    %105 = vmatpush.msra.mxu0 0.0
    %106 = vmatpush.msra.mxu0 0.0
    %107 = vmatpush.msra.mxu0 0.0
    %108 = vmatpush.msra.mxu0 0.0
    %109 = vmatpush.msra.mxu0 0.0
    %110 = vmatpush.msra.mxu0 0.0
    %111 = vmatpush.msra.mxu0 0.0
    %112 = vmatpush.msra.mxu0 0.0
    %113 = vmatpush.msra.mxu0 0.0
    %114 = vmatpush.msra.mxu0 0.0
    %115 = vmatpush.msra.mxu0 0.0
    %116 = vmatpush.msra.mxu0 0.0
    %117 = vmatpush.msra.mxu0 %v37
    %118 = vmatpush.msra.mxu0 %v36
    %119 = vmatpush.msra.mxu0 %v35
    %120 = vmatpush.msra.mxu0 %v34
    %121 = vmatmul.f32.gmra.mxu0 %v103
    %v122 = vpop.f32.mrf.mxu0
    %v123 = vadd.f32 0.0, %v122
    %124 = vdwg.mxu0
    %v125 = vadd.f32 %v102, %v123
    %v126 = vmul.f32 %v125, %v43
    %v127 = vtanh.pop %v126
    %v128 = vmul.f32 %v127, 0.5
    %v129 = vadd.f32 %v128, 0.5
    %v130 = vsel %vm42, %v127, %v129
    %v131 = vmul.f32 %v130, %v87
    %133 = vrot.lane.b32.xlu0 %v130, 64
    %v134 = vpop.permute.xlu0 %133
    %v136 = vmul.f32 %v130, %v134
    %138 = vrot.lane.b32.xlu0 %v136, 32
    %v139 = vpop.permute.xlu0 %138
    %v141 = vadd.f32 %v131, %v139
    %v142 = vtanh.pop %v141
    %144 = vrot.lane.b32.xlu0 %v142, 64
    %v145 = vpop.permute.xlu0 %144
    %v147 = vmul.f32 %v130, %v145
    %149 = vrot.lane.b32.xlu0 %v147, 32
    %v150 = vpop.permute.xlu0 %149
    %152 = vst.msk [vmem:[#allocation2 + $0x1] sm:$0x1] %vm98, %v150
    %s153 = sld [smem:[#allocation4 + $0x2]]
    %s154 = scalar_lea.vmem [#allocation5], %s153
    %v155 = vld [vmem:[%s154] sm:$0x1]
    %v156 = vsel %vm47, %v150, 0
    %158 = vmatpush.msra.mxu0 0.0
    %159 = vmatpush.msra.mxu0 0.0
    %160 = vmatpush.msra.mxu0 0.0
    %161 = vmatpush.msra.mxu0 0.0
    %162 = vmatpush.msra.mxu0 0.0
    %163 = vmatpush.msra.mxu0 0.0
    %164 = vmatpush.msra.mxu0 0.0
    %165 = vmatpush.msra.mxu0 0.0
    %166 = vmatpush.msra.mxu0 0.0
    %167 = vmatpush.msra.mxu0 0.0
    %168 = vmatpush.msra.mxu0 0.0
    %169 = vmatpush.msra.mxu0 0.0
    %170 = vmatpush.msra.mxu0 %v37
    %171 = vmatpush.msra.mxu0 %v36
    %172 = vmatpush.msra.mxu0 %v35
    %173 = vmatpush.msra.mxu0 %v34
    %174 = vmatmul.f32.gmra.mxu0 %v156
    %v175 = vpop.f32.mrf.mxu0
    %v176 = vadd.f32 0.0, %v175
    %177 = vdwg.mxu0
    %v178 = vadd.f32 %v155, %v176
    %v179 = vmul.f32 %v178, %v43
    %v180 = vtanh.pop %v179
    %v181 = vmul.f32 %v180, 0.5
    %v182 = vadd.f32 %v181, 0.5
    %v183 = vsel %vm42, %v180, %v182
    %v184 = vmul.f32 %v183, %v141
    %186 = vrot.lane.b32.xlu0 %v183, 64
    %v187 = vpop.permute.xlu0 %186
    %v189 = vmul.f32 %v183, %v187
    %191 = vrot.lane.b32.xlu0 %v189, 32
    %v192 = vpop.permute.xlu0 %191
    %v194 = vadd.f32 %v184, %v192
    %v195 = vtanh.pop %v194
    %197 = vrot.lane.b32.xlu0 %v195, 64
    %v198 = vpop.permute.xlu0 %197
    %v200 = vmul.f32 %v183, %v198
    %202 = vrot.lane.b32.xlu0 %v200, 32
    %v203 = vpop.permute.xlu0 %202
    %205 = vst.msk [vmem:[#allocation2 + $0x2] sm:$0x1] %vm98, %v203
    %s206 = sld [smem:[#allocation4 + $0x3]]
    %s207 = scalar_lea.vmem [#allocation5], %s206
    %v208 = vld [vmem:[%s207] sm:$0x1]
    %v209 = vsel %vm47, %v203, 0
    %211 = vmatpush.msra.mxu0 0.0
    %212 = vmatpush.msra.mxu0 0.0
    %213 = vmatpush.msra.mxu0 0.0
    %214 = vmatpush.msra.mxu0 0.0
    %215 = vmatpush.msra.mxu0 0.0
    %216 = vmatpush.msra.mxu0 0.0
    %217 = vmatpush.msra.mxu0 0.0
    %218 = vmatpush.msra.mxu0 0.0
    %219 = vmatpush.msra.mxu0 0.0
    %220 = vmatpush.msra.mxu0 0.0
    %221 = vmatpush.msra.mxu0 0.0
    %222 = vmatpush.msra.mxu0 0.0
    %223 = vmatpush.msra.mxu0 %v37
    %224 = vmatpush.msra.mxu0 %v36
    %225 = vmatpush.msra.mxu0 %v35
    %226 = vmatpush.msra.mxu0 %v34
    %227 = vmatmul.f32.gmra.mxu0 %v209
    %v228 = vpop.f32.mrf.mxu0
    %v229 = vadd.f32 0.0, %v228
    %230 = vdwg.mxu0
    %v231 = vadd.f32 %v208, %v229
    %v232 = vmul.f32 %v231, %v43
    %v233 = vtanh.pop %v232
    %v234 = vmul.f32 %v233, 0.5
    %v235 = vadd.f32 %v234, 0.5
    %v236 = vsel %vm42, %v233, %v235
    %v237 = vmul.f32 %v236, %v194
    %239 = vrot.lane.b32.xlu0 %v236, 64
    %v240 = vpop.permute.xlu0 %239
    %v242 = vmul.f32 %v236, %v240
    %244 = vrot.lane.b32.xlu0 %v242, 32
    %v245 = vpop.permute.xlu0 %244
    %v247 = vadd.f32 %v237, %v245
    %v248 = vtanh.pop %v247
    %250 = vrot.lane.b32.xlu0 %v248, 64
    %v251 = vpop.permute.xlu0 %250
    %v253 = vmul.f32 %v236, %v251
    %255 = vrot.lane.b32.xlu0 %v253, 32
    %v256 = vpop.permute.xlu0 %255
    %258 = vst.msk [vmem:[#allocation2 + $0x3] sm:$0x1] %vm98, %v256
    %s259 = sld [smem:[#allocation4 + $0x4]]
    %s260 = scalar_lea.vmem [#allocation5], %s259
    %v261 = vld [vmem:[%s260] sm:$0x1]
    %v262 = vsel %vm47, %v256, 0
    %264 = vmatpush.msra.mxu0 0.0
    %265 = vmatpush.msra.mxu0 0.0
    %266 = vmatpush.msra.mxu0 0.0
    %267 = vmatpush.msra.mxu0 0.0
    %268 = vmatpush.msra.mxu0 0.0
    %269 = vmatpush.msra.mxu0 0.0
    %270 = vmatpush.msra.mxu0 0.0
    %271 = vmatpush.msra.mxu0 0.0
    %272 = vmatpush.msra.mxu0 0.0
    %273 = vmatpush.msra.mxu0 0.0
    %274 = vmatpush.msra.mxu0 0.0
    %275 = vmatpush.msra.mxu0 0.0
    %276 = vmatpush.msra.mxu0 %v37
    %277 = vmatpush.msra.mxu0 %v36
    %278 = vmatpush.msra.mxu0 %v35
    %279 = vmatpush.msra.mxu0 %v34
    %280 = vmatmul.f32.gmra.mxu0 %v262
    %v281 = vpop.f32.mrf.mxu0
    %v282 = vadd.f32 0.0, %v281
    %283 = vdwg.mxu0
    %v284 = vadd.f32 %v261, %v282
    %v285 = vmul.f32 %v284, %v43
    %v286 = vtanh.pop %v285
    %v287 = vmul.f32 %v286, 0.5
    %v288 = vadd.f32 %v287, 0.5
    %v289 = vsel %vm42, %v286, %v288
    %v290 = vmul.f32 %v289, %v247
    %292 = vrot.lane.b32.xlu0 %v289, 64
    %v293 = vpop.permute.xlu0 %292
    %v295 = vmul.f32 %v289, %v293
    %297 = vrot.lane.b32.xlu0 %v295, 32
    %v298 = vpop.permute.xlu0 %297
    %v300 = vadd.f32 %v290, %v298
    %v301 = vtanh.pop %v300
    %303 = vrot.lane.b32.xlu0 %v301, 64
    %v304 = vpop.permute.xlu0 %303
    %v306 = vmul.f32 %v289, %v304
    %308 = vrot.lane.b32.xlu0 %v306, 32
    %v309 = vpop.permute.xlu0 %308
    %311 = vst.msk [vmem:[#allocation2 + $0x4] sm:$0x1] %vm98, %v309
    %s312 = sld [smem:[#allocation4 + $0x5]]
    %s313 = scalar_lea.vmem [#allocation5], %s312
    %v314 = vld [vmem:[%s313] sm:$0x1]
    %v315 = vsel %vm47, %v309, 0
    %317 = vmatpush.msra.mxu0 0.0
    %318 = vmatpush.msra.mxu0 0.0
    %319 = vmatpush.msra.mxu0 0.0
    %320 = vmatpush.msra.mxu0 0.0
    %321 = vmatpush.msra.mxu0 0.0
    %322 = vmatpush.msra.mxu0 0.0
    %323 = vmatpush.msra.mxu0 0.0
    %324 = vmatpush.msra.mxu0 0.0
    %325 = vmatpush.msra.mxu0 0.0
    %326 = vmatpush.msra.mxu0 0.0
    %327 = vmatpush.msra.mxu0 0.0
    %328 = vmatpush.msra.mxu0 0.0
    %329 = vmatpush.msra.mxu0 %v37
    %330 = vmatpush.msra.mxu0 %v36
    %331 = vmatpush.msra.mxu0 %v35
    %332 = vmatpush.msra.mxu0 %v34
    %333 = vmatmul.f32.gmra.mxu0 %v315
    %v334 = vpop.f32.mrf.mxu0
    %v335 = vadd.f32 0.0, %v334
    %336 = vdwg.mxu0
    %v337 = vadd.f32 %v314, %v335
    %v338 = vmul.f32 %v337, %v43
    %v339 = vtanh.pop %v338
    %v340 = vmul.f32 %v339, 0.5
    %v341 = vadd.f32 %v340, 0.5
    %v342 = vsel %vm42, %v339, %v341
    %v343 = vmul.f32 %v342, %v300
    %345 = vrot.lane.b32.xlu0 %v342, 64
    %v346 = vpop.permute.xlu0 %345
    %v348 = vmul.f32 %v342, %v346
    %350 = vrot.lane.b32.xlu0 %v348, 32
    %v351 = vpop.permute.xlu0 %350
    %v353 = vadd.f32 %v343, %v351
    %v354 = vtanh.pop %v353
    %356 = vrot.lane.b32.xlu0 %v354, 64
    %v357 = vpop.permute.xlu0 %356
    %v359 = vmul.f32 %v342, %v357
    %361 = vrot.lane.b32.xlu0 %v359, 32
    %v362 = vpop.permute.xlu0 %361
    %364 = vst.msk [vmem:[#allocation2 + $0x5] sm:$0x1] %vm98, %v362
    %s365 = sld [smem:[#allocation4 + $0x6]]
    %s366 = scalar_lea.vmem [#allocation5], %s365
    %v367 = vld [vmem:[%s366] sm:$0x1]
    %v368 = vsel %vm47, %v362, 0
    %370 = vmatpush.msra.mxu0 0.0
    %371 = vmatpush.msra.mxu0 0.0
    %372 = vmatpush.msra.mxu0 0.0
    %373 = vmatpush.msra.mxu0 0.0
    %374 = vmatpush.msra.mxu0 0.0
    %375 = vmatpush.msra.mxu0 0.0
    %376 = vmatpush.msra.mxu0 0.0
    %377 = vmatpush.msra.mxu0 0.0
    %378 = vmatpush.msra.mxu0 0.0
    %379 = vmatpush.msra.mxu0 0.0
    %380 = vmatpush.msra.mxu0 0.0
    %381 = vmatpush.msra.mxu0 0.0
    %382 = vmatpush.msra.mxu0 %v37
    %383 = vmatpush.msra.mxu0 %v36
    %384 = vmatpush.msra.mxu0 %v35
    %385 = vmatpush.msra.mxu0 %v34
    %386 = vmatmul.f32.gmra.mxu0 %v368
    %v387 = vpop.f32.mrf.mxu0
    %v388 = vadd.f32 0.0, %v387
    %389 = vdwg.mxu0
    %v390 = vadd.f32 %v367, %v388
    %v391 = vmul.f32 %v390, %v43
    %v392 = vtanh.pop %v391
    %v393 = vmul.f32 %v392, 0.5
    %v394 = vadd.f32 %v393, 0.5
    %v395 = vsel %vm42, %v392, %v394
    %v396 = vmul.f32 %v395, %v353
    %398 = vrot.lane.b32.xlu0 %v395, 64
    %v399 = vpop.permute.xlu0 %398
    %v401 = vmul.f32 %v395, %v399
    %403 = vrot.lane.b32.xlu0 %v401, 32
    %v404 = vpop.permute.xlu0 %403
    %v406 = vadd.f32 %v396, %v404
    %v407 = vtanh.pop %v406
    %409 = vrot.lane.b32.xlu0 %v407, 64
    %v410 = vpop.permute.xlu0 %409
    %v412 = vmul.f32 %v395, %v410
    %414 = vrot.lane.b32.xlu0 %v412, 32
    %v415 = vpop.permute.xlu0 %414
    %417 = vst.msk [vmem:[#allocation2 + $0x6] sm:$0x1] %vm98, %v415
    %s418 = sld [smem:[#allocation4 + $0x7]]
    %s419 = scalar_lea.vmem [#allocation5], %s418
    %v420 = vld [vmem:[%s419] sm:$0x1]
    %v421 = vsel %vm47, %v415, 0
    %423 = vmatpush.msra.mxu0 0.0
    %424 = vmatpush.msra.mxu0 0.0
    %425 = vmatpush.msra.mxu0 0.0
    %426 = vmatpush.msra.mxu0 0.0
    %427 = vmatpush.msra.mxu0 0.0
    %428 = vmatpush.msra.mxu0 0.0
    %429 = vmatpush.msra.mxu0 0.0
    %430 = vmatpush.msra.mxu0 0.0
    %431 = vmatpush.msra.mxu0 0.0
    %432 = vmatpush.msra.mxu0 0.0
    %433 = vmatpush.msra.mxu0 0.0
    %434 = vmatpush.msra.mxu0 0.0
    %435 = vmatpush.msra.mxu0 %v37
    %436 = vmatpush.msra.mxu0 %v36
    %437 = vmatpush.msra.mxu0 %v35
    %438 = vmatpush.msra.mxu0 %v34
    %439 = vmatmul.f32.gmra.mxu0 %v421
    %v440 = vpop.f32.mrf.mxu0
    %v441 = vadd.f32 0.0, %v440
    %442 = vdwg.mxu0
    %v443 = vadd.f32 %v420, %v441
    %v444 = vmul.f32 %v443, %v43
    %v445 = vtanh.pop %v444
    %v446 = vmul.f32 %v445, 0.5
    %v447 = vadd.f32 %v446, 0.5
    %v448 = vsel %vm42, %v445, %v447
    %v449 = vmul.f32 %v448, %v406
    %451 = vrot.lane.b32.xlu0 %v448, 64
    %v452 = vpop.permute.xlu0 %451
    %v454 = vmul.f32 %v448, %v452
    %456 = vrot.lane.b32.xlu0 %v454, 32
    %v457 = vpop.permute.xlu0 %456
    %v459 = vadd.f32 %v449, %v457
    %v460 = vtanh.pop %v459
    %462 = vrot.lane.b32.xlu0 %v460, 64
    %v463 = vpop.permute.xlu0 %462
    %v465 = vmul.f32 %v448, %v463
    %467 = vrot.lane.b32.xlu0 %v465, 32
    %v468 = vpop.permute.xlu0 %467
    %470 = vst.msk [vmem:[#allocation2 + $0x7] sm:$0x1] %vm98, %v468
    %v471 = vld [vmem:[#allocation2] sm:$0xff]
    %v472 = vld [vmem:[#allocation5 + $0x38] sm:$0xff]
    %v473 = vld [vmem:[#allocation5 + $0x40] sm:$0xff]
    %v474 = vld [vmem:[#allocation5 + $0x48] sm:$0xff]
    %v475 = vld [vmem:[#allocation5 + $0x50] sm:$0xff]
    %v476 = vld [vmem:[#allocation5 + $0x58] sm:$0x1]
    %v477 = vperm.slane %v476, 0
    %v479 = vsel %vm47, %v471, 0
    %481 = vmatpush.msra.mxu0 0.0
    %482 = vmatpush.msra.mxu0 0.0
    %483 = vmatpush.msra.mxu0 0.0
    %484 = vmatpush.msra.mxu0 0.0
    %485 = vmatpush.msra.mxu0 0.0
    %486 = vmatpush.msra.mxu0 0.0
    %487 = vmatpush.msra.mxu0 0.0
    %488 = vmatpush.msra.mxu0 0.0
    %489 = vmatpush.msra.mxu0 0.0
    %490 = vmatpush.msra.mxu0 0.0
    %491 = vmatpush.msra.mxu0 0.0
    %492 = vmatpush.msra.mxu0 0.0
    %493 = vmatpush.msra.mxu0 %v475
    %494 = vmatpush.msra.mxu0 %v474
    %495 = vmatpush.msra.mxu0 %v473
    %496 = vmatpush.msra.mxu0 %v472
    %497 = vmatmul.f32.gmra.mxu0 %v479
    %v498 = vpop.f32.mrf.mxu0
    %v499 = vadd.f32 %v477, %v498
    %500 = vdwg.mxu0
    %501 = vmax.xlane.f32.xlu0 %v499
    %v502 = vpop.xlane.xlu0 %501
    %v503 = vsub.f32 %v499, %v502
    %v504 = vmul.f32 %v503, 1.442695
    %v505 = vpow.pop %v504
    %506 = vadd.xlane.f32.xlu0 %v505
    %v507 = vpop.xlane.xlu0 %506
    %v508 = vlog2.pop %v507
    %v509 = vmul.f32 %v508, 0.6931472
    %v510 = vsub.f32 %v503, %v509
    %vm511 = vcmask 64512
    %512 = vst.msk [vmem:[#allocation8] sm:$0xff] %vm511, %v510
    // Predicated region
    $region10: #{tpu_custom_call.1} parent=1 // pred_check
      _
    $region11: #{tpu_custom_call.1} parent=1 // pred_check_branch
      %514 = sbr.rel (0) target = $region13
    $region12: #{tpu_custom_call.1} parent=1 // pred_region
      %516 = vsyncadd [#allocation7], 0
      %s518 = sshll.u32 [#allocation8], 4
      %s519 = int_to_ptr.vmem [resolvable:$true] %s518
      %s520 = sshll.u32 %s2, 4
      %s521 = int_to_ptr.hbm [resolvable:$true] %s520
      %523 = dma.vmem_to_hbm [thread:$0]  %s519, 128, %s521, [#allocation7]
    $region13: #{tpu_custom_call.1} parent=1 // pred_fallthru
      _
    // Predicated region
    $region14: #{tpu_custom_call.1} parent=1 // pred_check
      _
    $region15: #{tpu_custom_call.1} parent=1 // pred_check_branch
      %525 = sbr.rel (0) target = $region17
    $region16: #{tpu_custom_call.1} parent=1 // pred_region
      %527 = dma.done [#allocation7], 128
    $region17: #{tpu_custom_call.1} parent=1 // pred_fallthru
      _
    %528 = vsyncpa [#allocation6], 1
    %529 = vsyncpa [#allocation7], 1

</llo_original>
